<compile_context>
chip_gen: v7x
topology: tpu7x:2x2x1
jax: 0.10.0
libtpu: 0.0.40
codegen_flags: <defaults>
</compile_context>

<pallas_src>
import jax
import jax.numpy as jnp
from jax.experimental import pallas as pl
from jax.experimental.pallas import tpu as pltpu

_NUM_CORE_SPLITS = 2                      # v7x has 2 TensorCores; harmless elsewhere
_TARGET_BLOCK_BYTES = 8 * 1024 * 1024     # per input block (x2 for double-buffering)
_VMEM_LIMIT_BYTES = 32 * 1024 * 1024


def _round_up(v, m):
    return (v + m - 1) // m * m


def _tv_kernel(x_ref, h_out_ref, w_out_ref, h_acc, w_acc):
    # x_ref:      (TB, H, W) block of image planes for the current grid step.
    # h_out_ref:  (1, H-1, W) per-core partial-sum output (written once).
    # w_out_ref:  (1, H, W-1) per-core partial-sum output (written once).
    # h_acc/w_acc: f32 VMEM scratch accumulators, resident across the
    #              "arbitrary" grid axis.
    step = pl.program_id(1)

    @pl.when(step == 0)
    def _():
        h_acc[...] = jnp.zeros_like(h_acc)
        w_acc[...] = jnp.zeros_like(w_acc)

    x = x_ref[...].astype(jnp.float32)            # (TB, H, W)
    dh = x[:, 1:, :] - x[:, :-1, :]               # vertical diffs   (TB, H-1, W)
    dw = x[:, :, 1:] - x[:, :, :-1]               # horizontal diffs (TB, H, W-1)

    # Reduce only over the leading (plane) axis -> pure element-wise VPU adds;
    # the cross-lane/sublane reduction is deferred to the wrapper.
    h_acc[...] += jnp.sum(dh * dh, axis=0)        # (H-1, W)
    w_acc[...] += jnp.sum(dw * dw, axis=0)        # (H, W-1)

    @pl.when(step == pl.num_programs(1) - 1)
    def _():
        h_out_ref[...] = h_acc[...][None]
        w_out_ref[...] = w_acc[...][None]


def tv_loss(x, tv_loss_weight: float = 1.0):
    """Total-variation loss, matching TVLoss.forward exactly (NCHW input)."""
    b, c, h, w = x.shape
    bc = b * c
    x_flat = x.reshape(bc, h, w)
    itemsize = x.dtype.itemsize

    # Planes per grid step: biggest TB whose VMEM-padded block stays under the
    # target (VMEM pads the last two dims up to multiples of (8, 128)).
    plane_bytes = _round_up(h, 8) * _round_up(w, 128) * itemsize
    tb = int(max(1, min(_TARGET_BLOCK_BYTES // plane_bytes,
                        pl.cdiv(bc, _NUM_CORE_SPLITS))))
    # NOTE: a single plane larger than the target still maps to TB=1 full-plane
    # blocks; truly huge images would additionally need H-tiling.

    blocks_per_core = int(pl.cdiv(bc, _NUM_CORE_SPLITS * tb))
    bc_pad = _NUM_CORE_SPLITS * blocks_per_core * tb
    if bc_pad != bc:
        # Zero padding planes contribute zero to both TV sums (diffs never
        # cross the plane axis), so this is free correctness-wise.
        x_flat = jnp.pad(x_flat, ((0, bc_pad - bc), (0, 0), (0, 0)))

    grid = (_NUM_CORE_SPLITS, blocks_per_core)

    h_part, w_part = pl.pallas_call(
        _tv_kernel,
        out_shape=(
            jax.ShapeDtypeStruct((_NUM_CORE_SPLITS, h - 1, w), jnp.float32),
            jax.ShapeDtypeStruct((_NUM_CORE_SPLITS, h, w - 1), jnp.float32),
        ),
        grid_spec=pltpu.PrefetchScalarGridSpec(
            num_scalar_prefetch=0,
            grid=grid,
            in_specs=[
                pl.BlockSpec(
                    (tb, h, w),
                    lambda ci, i: (ci * blocks_per_core + i, 0, 0)),
            ],
            out_specs=(
                pl.BlockSpec((1, h - 1, w), lambda ci, i: (ci, 0, 0)),
                pl.BlockSpec((1, h, w - 1), lambda ci, i: (ci, 0, 0)),
            ),
            scratch_shapes=[
                pltpu.VMEM((h - 1, w), jnp.float32),
                pltpu.VMEM((h, w - 1), jnp.float32),
            ],
        ),
        compiler_params=pltpu.CompilerParams(
            dimension_semantics=("parallel", "arbitrary"),
            vmem_limit_bytes=_VMEM_LIMIT_BYTES,
        ),
        cost_estimate=pl.CostEstimate(
            flops=6 * bc * h * w,
            transcendentals=0,
            bytes_accessed=bc_pad * h * w * itemsize,
        ),
    )(x_flat)

    h_tv = jnp.sum(h_part)   # tiny (2, H-1, W) reduction in XLA
    w_tv = jnp.sum(w_part)   # tiny (2, H, W-1) reduction in XLA

    count_h = c * (h - 1) * w   # tensor_size(x[:, :, 1:, :])
    count_w = c * h * (w - 1)   # tensor_size(x[:, :, :, 1:])
    return tv_loss_weight * 2.0 * (h_tv / count_h + w_tv / count_w) / b


def _tv_loss_ref(x, tv_loss_weight: float = 1.0):
    """Pure-JAX reference (mirrors the PyTorch forward)."""
    b, c, h, w = x.shape
    count_h = c * (h - 1) * w
    count_w = c * h * (w - 1)
    h_tv = jnp.sum((x[:, :, 1:, :] - x[:, :, : h - 1, :]) ** 2)
    w_tv = jnp.sum((x[:, :, :, 1:] - x[:, :, :, : w - 1]) ** 2)
    return tv_loss_weight * 2.0 * (h_tv / count_h + w_tv / count_w) / b


if __name__ == "__main__":
    key = jax.random.PRNGKey(0)
    x = jax.random.normal(key, (2, 4, 16, 16), dtype=jnp.float32)

    out = jax.block_until_ready(tv_loss(x, tv_loss_weight=1.0))
    ref = jax.block_until_ready(_tv_loss_ref(x, tv_loss_weight=1.0))

    assert jnp.allclose(out, ref, rtol=1e-5, atol=1e-5), (out, ref)
    print("KERNEL_OK")
</pallas_src>

<mosaic_0001>
module attributes {stable_mosaic.version = 11 : i64} {
  func.func @_tv_kernel(%arg0: i32, %arg1: i32, %arg2: memref<4x16x16xf32, #tpu.memory_space<vmem>>, %arg3: memref<1x15x16xf32, #tpu.memory_space<vmem>>, %arg4: memref<1x16x15xf32, #tpu.memory_space<vmem>>, %arg5: memref<15x16xf32, #tpu.memory_space<vmem>>, %arg6: memref<16x15xf32, #tpu.memory_space<vmem>>) attributes {dimension_semantics = [#tpu.dimension_semantics<parallel>, #tpu.dimension_semantics<arbitrary>], iteration_bounds = array<i64: 2, 1>, scalar_prefetch = 0 : i64, scratch_operands = 2 : i64, tpu.core_type = #tpu.core_type<tc>, window_params = [{transform_indices = @transform_0, window_bounds = array<i64: 4, 16, 16>}, {transform_indices = @transform_1, window_bounds = array<i64: 1, 15, 16>}, {transform_indices = @transform_2, window_bounds = array<i64: 1, 16, 15>}]} {
    %c0_i32 = arith.constant 0 : i32
    %0 = arith.cmpi eq, %arg1, %c0_i32 : i32
    %1 = arith.extui %0 : i1 to i32
    %c0_i32_0 = arith.constant 0 : i32
    %2 = arith.cmpi ne, %1, %c0_i32_0 : i32
    scf.if %2 {
      %cst_14 = arith.constant 0.000000e+00 : f32
      %23 = vector.broadcast %cst_14 : f32 to vector<15x16xf32>
      %c0_15 = arith.constant 0 : index
      %c0_16 = arith.constant 0 : index
      %24 = vector.load %arg5[%c0_15, %c0_16] : memref<15x16xf32, #tpu.memory_space<vmem>>, vector<15x16xf32>
      tpu.vector_store %arg5[%c0_15, %c0_16], %23 {strides = array<i32>} : memref<15x16xf32, #tpu.memory_space<vmem>>, vector<15x16xf32>,
      %cst_17 = arith.constant 0.000000e+00 : f32
      %25 = vector.broadcast %cst_17 : f32 to vector<16x15xf32>
      %c0_18 = arith.constant 0 : index
      %c0_19 = arith.constant 0 : index
      %26 = vector.load %arg6[%c0_18, %c0_19] : memref<16x15xf32, #tpu.memory_space<vmem>>, vector<16x15xf32>
      tpu.vector_store %arg6[%c0_18, %c0_19], %25 {strides = array<i32>} : memref<16x15xf32, #tpu.memory_space<vmem>>, vector<16x15xf32>,
    } else {
    }
    %c0 = arith.constant 0 : index
    %c0_1 = arith.constant 0 : index
    %c0_2 = arith.constant 0 : index
    %3 = vector.load %arg2[%c0, %c0_1, %c0_2] : memref<4x16x16xf32, #tpu.memory_space<vmem>>, vector<4x16x16xf32>
    %4 = vector.extract_strided_slice %3 {offsets = [0, 1, 0], sizes = [4, 15, 16], strides = [1, 1, 1]} : vector<4x16x16xf32> to vector<4x15x16xf32>
    %5 = vector.extract_strided_slice %3 {offsets = [0, 0, 0], sizes = [4, 15, 16], strides = [1, 1, 1]} : vector<4x16x16xf32> to vector<4x15x16xf32>
    %6 = arith.subf %4, %5 : vector<4x15x16xf32>
    %7 = vector.extract_strided_slice %3 {offsets = [0, 0, 1], sizes = [4, 16, 15], strides = [1, 1, 1]} : vector<4x16x16xf32> to vector<4x16x15xf32>
    %8 = vector.extract_strided_slice %3 {offsets = [0, 0, 0], sizes = [4, 16, 15], strides = [1, 1, 1]} : vector<4x16x16xf32> to vector<4x16x15xf32>
    %9 = arith.subf %7, %8 : vector<4x16x15xf32>
    %c0_3 = arith.constant 0 : index
    %c0_4 = arith.constant 0 : index
    %10 = vector.load %arg5[%c0_3, %c0_4] : memref<15x16xf32, #tpu.memory_space<vmem>>, vector<15x16xf32>
    %11 = arith.mulf %6, %6 : vector<4x15x16xf32>
    %cst = arith.constant dense<0.000000e+00> : vector<15x16xf32>
    %12 = vector.multi_reduction <add>, %11, %cst [0] : vector<4x15x16xf32> to vector<15x16xf32>
    %13 = arith.addf %10, %12 : vector<15x16xf32>
    %c0_5 = arith.constant 0 : index
    %c0_6 = arith.constant 0 : index
    %14 = vector.load %arg5[%c0_5, %c0_6] : memref<15x16xf32, #tpu.memory_space<vmem>>, vector<15x16xf32>
    tpu.vector_store %arg5[%c0_5, %c0_6], %13 {strides = array<i32>} : memref<15x16xf32, #tpu.memory_space<vmem>>, vector<15x16xf32>,
    %c0_7 = arith.constant 0 : index
    %c0_8 = arith.constant 0 : index
    %15 = vector.load %arg6[%c0_7, %c0_8] : memref<16x15xf32, #tpu.memory_space<vmem>>, vector<16x15xf32>
    %16 = arith.mulf %9, %9 : vector<4x16x15xf32>
    %cst_9 = arith.constant dense<0.000000e+00> : vector<16x15xf32>
    %17 = vector.multi_reduction <add>, %16, %cst_9 [0] : vector<4x16x15xf32> to vector<16x15xf32>
    %18 = arith.addf %15, %17 : vector<16x15xf32>
    %c0_10 = arith.constant 0 : index
    %c0_11 = arith.constant 0 : index
    %19 = vector.load %arg6[%c0_10, %c0_11] : memref<16x15xf32, #tpu.memory_space<vmem>>, vector<16x15xf32>
    tpu.vector_store %arg6[%c0_10, %c0_11], %18 {strides = array<i32>} : memref<16x15xf32, #tpu.memory_space<vmem>>, vector<16x15xf32>,
    %c0_i32_12 = arith.constant 0 : i32
    %20 = arith.cmpi eq, %arg1, %c0_i32_12 : i32
    %21 = arith.extui %20 : i1 to i32
    %c0_i32_13 = arith.constant 0 : i32
    %22 = arith.cmpi ne, %21, %c0_i32_13 : i32
    scf.if %22 {
      %c0_14 = arith.constant 0 : index
      %c0_15 = arith.constant 0 : index
      %23 = vector.load %arg5[%c0_14, %c0_15] : memref<15x16xf32, #tpu.memory_space<vmem>>, vector<15x16xf32>
      %24 = vector.shape_cast %23 : vector<15x16xf32> to vector<1x15x16xf32>
      %c0_16 = arith.constant 0 : index
      %c0_17 = arith.constant 0 : index
      %c0_18 = arith.constant 0 : index
      %25 = vector.load %arg3[%c0_16, %c0_17, %c0_18] : memref<1x15x16xf32, #tpu.memory_space<vmem>>, vector<1x15x16xf32>
      tpu.vector_store %arg3[%c0_16, %c0_17, %c0_18], %24 {strides = array<i32>} : memref<1x15x16xf32, #tpu.memory_space<vmem>>, vector<1x15x16xf32>,
      %c0_19 = arith.constant 0 : index
      %c0_20 = arith.constant 0 : index
      %26 = vector.load %arg6[%c0_19, %c0_20] : memref<16x15xf32, #tpu.memory_space<vmem>>, vector<16x15xf32>
      %27 = vector.shape_cast %26 : vector<16x15xf32> to vector<1x16x15xf32>
      %c0_21 = arith.constant 0 : index
      %c0_22 = arith.constant 0 : index
      %c0_23 = arith.constant 0 : index
      %28 = vector.load %arg4[%c0_21, %c0_22, %c0_23] : memref<1x16x15xf32, #tpu.memory_space<vmem>>, vector<1x16x15xf32>
      tpu.vector_store %arg4[%c0_21, %c0_22, %c0_23], %27 {strides = array<i32>} : memref<1x16x15xf32, #tpu.memory_space<vmem>>, vector<1x16x15xf32>,
    } else {
    }
    return
  }
  func.func @transform_0(%arg0: i32, %arg1: i32) -> (i32, i32, i32) {
    %c1_i32 = arith.constant 1 : i32
    %0 = arith.muli %arg0, %c1_i32 : i32
    %1 = arith.addi %0, %arg1 : i32
    %c0_i32 = arith.constant 0 : i32
    %c0_i32_0 = arith.constant 0 : i32
    %c0_i32_1 = arith.constant 0 : i32
    return %1, %c0_i32, %c0_i32_0 : i32, i32, i32
  }
  func.func @transform_1(%arg0: i32, %arg1: i32) -> (i32, i32, i32) {
    %c0_i32 = arith.constant 0 : i32
    %c0_i32_0 = arith.constant 0 : i32
    %c0_i32_1 = arith.constant 0 : i32
    return %arg0, %c0_i32, %c0_i32_0 : i32, i32, i32
  }
  func.func @transform_2(%arg0: i32, %arg1: i32) -> (i32, i32, i32) {
    %c0_i32 = arith.constant 0 : i32
    %c0_i32_0 = arith.constant 0 : i32
    %c0_i32_1 = arith.constant 0 : i32
    return %arg0, %c0_i32, %c0_i32_0 : i32, i32, i32
  }
}

</mosaic_0001>

<llo_original>
// kernel: tpu_custom_call.1
$region0: #{tpu_custom_call.1}
  #allocation0 [shape = 'u32[]', space=smem, size = 0x4, offset = 0x4, fixed_abs, tag = 'smem constant byte address 0x4 - core index']
  #allocation1 [shape = 'u32[144,128]{1,0:T(1,128)}', space=vmem, size = 0x12000, scoped, tag = 'internal scratch']
  #allocation2 [shape = 'f32[15,16]{1,0:T(8,128)}', space=vmem, size = 0x2000, scoped, tag = 'scratch operand']
  #allocation3 [shape = 'f32[16,15]{1,0:T(8,128)}', space=vmem, size = 0x2000, scoped, tag = 'scratch operand']
  %s0 = inlined_call_operand.hbm [shape: f32[8,16,16], index: 0, kind: input, shape index: {}]
  %s1 = inlined_call_operand.vmem [shape: f32[2,15,16], index: 1, kind: output, shape index: {0}]
  %s2 = inlined_call_operand.vmem [shape: f32[2,16,15], index: 2, kind: output, shape index: {1}]
  %3 = xla_tuple %s1, %s2
  %s4 = sld [smem:[#allocation0]]
  $region57: #{tpu_custom_call.1} parent=0
    _
  %s6 = ssub.s32 1, %s4
  %s7 = scalar_select 0, %s6, %s4
  $region1: #{tpu_custom_call.1} parent=0
    #allocation4 [shape = 'u8[65536]{0}', space=vmem, size = 0x10000, scoped, tag = 'input window, operand 0']
    #allocation5 [shape = 's32[2]{0}', space=sflag, size = 0x8, scoped, tag = 'scoped memory for tpu_custom_call.1']
    %8 = vsyncpa [#allocation5], 0
    %s9 = scalar_lea.sflag [#allocation5], 1
    %10 = vsyncpa %s9, 0
    loop: start=0, step=1, limit=4
    $region2: #{tpu_custom_call.1} parent=1 // loop_pre_header
      _
    $region3: #{tpu_custom_call.1} parent=1 // loop_header
      %s12 = sphi 0, %s16
      %p13 = scmp.ge.s32.totalorder %s12, 4
      %s19 = sphi 0, %s31
      %s20 = sphi 0, %s27
      %s21 = sphi 0, %s19
      %s22 = sphi 0, %s20
      %s23 = sphi 0, %s21
      %s24 = sphi 0, %s22
      %s36 = sphi 0, %s38
      %s39 = sphi 0, %s36
      %s40 = sphi 0, %s39
      %s56 = sphi 0, %s40
      %s62 = sphi 0, %s64
      %s65 = sphi 0, %s62
      %s66 = sphi 0, %s65
      %s82 = sphi 0, %s66
      %s88 = sphi 0, %s90
      %s91 = sphi 0, %s88
      %s92 = sphi 0, %s91
      %s108 = sphi 0, %s92
    $region4: #{tpu_custom_call.1} parent=1 // loop_header_branch
      %15 = sbr.rel (%p13) target = $region8
    $region5: #{tpu_custom_call.1} parent=1 // loop_body
      %s17 = ssub.s32 %s12, 1
      %s18 = ssub.s32 %s12, 2
      %s25 = sadd.s32 1, %s20
      %p26 = scmp.ge.s32.totalorder %s25, 1
      %s27 = scalar_select %p26, 0, %s25
      %s28 = sadd.s32 1, %s19
      %s29 = scalar_select %p26, %s28, %s19
      %p30 = scmp.ge.s32.totalorder %s29, 2
      %s31 = scalar_select %p30, 0, %s29
      %s32 = sadd.s32 %s19, %s20
      %s33 = sadd.s32 %s31, %s27
      %s34 = ssub.s32 %s32, %s33
      %p35 = scmp.eq.s32.totalorder %s34, 0
      %s37 = sadd.s32 %s36, 1
      %s38 = scalar_select %p35, %s36, %s37
      %p41 = pneg %p35
      %p42 = scmp.eq.s32.totalorder %s12, 1
      %p43 = por %p41, %p42
      %p44 = scmp.ne.s32.totalorder %s36, %s39
      %p45 = scmp.eq.s32.totalorder %s12, 0
      %p46 = por %p44, %p45
      %p47 = scmp.ne.s32.totalorder %s36, %s39
      %p48 = scmp.eq.s32.totalorder %s17, 1
      %p49 = por %p47, %p48
      %p50 = scmp.ne.s32.totalorder %s39, %s40
      %p51 = scmp.eq.s32.totalorder %s17, 0
      %p52 = por %p50, %p51
      %p53 = scmp.ne.s32.totalorder %s39, %s40
      %p54 = scmp.eq.s32.totalorder %s18, 1
      %p55 = por %p53, %p54
      %p57 = scmp.ne.s32.totalorder %s40, %s56
      %p58 = scmp.eq.s32.totalorder %s18, 0
      %p59 = por %p57, %p58
      %s60 = ssub.s32 %s19, %s31
      %p61 = scmp.eq.s32.totalorder %s60, 0
      %s63 = sadd.s32 %s62, 1
      %s64 = scalar_select %p61, %s62, %s63
      %p67 = pneg %p61
      %p68 = scmp.eq.s32.totalorder %s12, 1
      %p69 = por %p67, %p68
      %p70 = scmp.ne.s32.totalorder %s62, %s65
      %p71 = scmp.eq.s32.totalorder %s12, 0
      %p72 = por %p70, %p71
      %p73 = scmp.ne.s32.totalorder %s62, %s65
      %p74 = scmp.eq.s32.totalorder %s17, 1
      %p75 = por %p73, %p74
      %p76 = scmp.ne.s32.totalorder %s65, %s66
      %p77 = scmp.eq.s32.totalorder %s17, 0
      %p78 = por %p76, %p77
      %p79 = scmp.ne.s32.totalorder %s65, %s66
      %p80 = scmp.eq.s32.totalorder %s18, 1
      %p81 = por %p79, %p80
      %p83 = scmp.ne.s32.totalorder %s66, %s82
      %p84 = scmp.eq.s32.totalorder %s18, 0
      %p85 = por %p83, %p84
      %s86 = ssub.s32 %s19, %s31
      %p87 = scmp.eq.s32.totalorder %s86, 0
      %s89 = sadd.s32 %s88, 1
      %s90 = scalar_select %p87, %s88, %s89
      %p93 = pneg %p87
      %p94 = scmp.eq.s32.totalorder %s12, 1
      %p95 = por %p93, %p94
      %p96 = scmp.ne.s32.totalorder %s88, %s91
      %p97 = scmp.eq.s32.totalorder %s12, 0
      %p98 = por %p96, %p97
      %p99 = scmp.ne.s32.totalorder %s88, %s91
      %p100 = scmp.eq.s32.totalorder %s17, 1
      %p101 = por %p99, %p100
      %p102 = scmp.ne.s32.totalorder %s91, %s92
      %p103 = scmp.eq.s32.totalorder %s17, 0
      %p104 = por %p102, %p103
      %p105 = scmp.ne.s32.totalorder %s91, %s92
      %p106 = scmp.eq.s32.totalorder %s18, 1
      %p107 = por %p105, %p106
      %p109 = scmp.ne.s32.totalorder %s92, %s108
      %p110 = scmp.eq.s32.totalorder %s18, 0
      %p111 = por %p109, %p110
      %p112 = scmp.le.s32.totalorder 1, %s12
      %p113 = scmp.lt.s32.totalorder %s12, 3
      %p114 = pnand %p112, %p113
      %p115 = pneg %p114
      // Predicated region
      $region9: #{tpu_custom_call.1} parent=5 // pred_check
        _
      $region10: #{tpu_custom_call.1} parent=5 // pred_check_branch
        %117 = sbr.rel (%p114) target = $region12
      $region11: #{tpu_custom_call.1} parent=5 // pred_region
        %s118 = ssub.s32 %s12, 1
      $region12: #{tpu_custom_call.1} parent=5 // pred_fallthru
        _
      %p119 = scmp.lt.s32.totalorder %s12, 2
      // Predicated region
      $region13: #{tpu_custom_call.1} parent=5 // pred_check
        %p120 = pneg %p119
      $region14: #{tpu_custom_call.1} parent=5 // pred_check_branch
        %122 = sbr.rel (%p120) target = $region16
      $region15: #{tpu_custom_call.1} parent=5 // pred_region
        // Predicated region
        $region17: #{tpu_custom_call.1} parent=15 // pred_check
          %p123 = pneg %p46
        $region18: #{tpu_custom_call.1} parent=15 // pred_check_branch
          %125 = sbr.rel (%p123) target = $region20
        $region19: #{tpu_custom_call.1} parent=15 // pred_region
          %s126 = sand.u32 %s36, 1
          %s127 = scalar_lea.sflag [#allocation5], %s126
          %s128 = sand.u32 %s36, 1
          %s129 = smul.addr %s128, 64
          %s130 = scalar_lea.vmem [#allocation4], %s129
          %s131 = sadd.s32 %s19, %s20
          %s132 = smul.u32 4, %s131
          %s134 = ssub.s32 1024, 1024
          %135 = vsyncadd %s127, %s134
          %s136 = smul.addr %s132, 2
          %s137 = smul.addr %s136, 128
          %s138 = scalar_lea.hbm %s0, %s137
          %s139 = sshll.u32 %s130, 4
          %s140 = int_to_ptr.vmem [resolvable:$true] %s139
          %145 = dma.hbm_to_vmem [thread:$0]  %s138, 1024, %s140, %s127, 128, 128, 8
        $region20: #{tpu_custom_call.1} parent=15 // pred_fallthru
          _
      $region16: #{tpu_custom_call.1} parent=5 // pred_fallthru
        _
      %p146 = scmp.le.s32.totalorder 1, %s12
      %p147 = scmp.lt.s32.totalorder %s12, 3
      %p148 = pnand %p146, %p147
      %p149 = pneg %p148
      // Predicated region
      $region21: #{tpu_custom_call.1} parent=5 // pred_check
        _
      $region22: #{tpu_custom_call.1} parent=5 // pred_check_branch
        %151 = sbr.rel (%p148) target = $region24
      $region23: #{tpu_custom_call.1} parent=5 // pred_region
        %s152 = ssub.s32 %s12, 1
        %s153 = sand.u32 %s39, 1
        %s154 = scalar_lea.sflag [#allocation5], %s153
        %s155 = sand.u32 %s39, 1
        %s156 = smul.addr %s155, 64
        %s157 = scalar_lea.vmem [#allocation4], %s156
        // Predicated region
        $region25: #{tpu_custom_call.1} parent=23 // pred_check
          %p158 = pneg %p52
        $region26: #{tpu_custom_call.1} parent=23 // pred_check_branch
          %160 = sbr.rel (%p158) target = $region28
        $region27: #{tpu_custom_call.1} parent=23 // pred_region
          %161 = dma.done %s154, 1024
        $region28: #{tpu_custom_call.1} parent=23 // pred_fallthru
          _
        %s162 = sand.u32 %s39, 1
        %s163 = scalar_lea.sflag [#allocation5], %s162
        %s164 = sand.u32 %s39, 1
        %s165 = smul.addr %s164, 64
        %s166 = scalar_lea.vmem [#allocation4], %s165
        %p167 = pneg %p52
        %p168 = pneg %p49
        %p169 = pneg %p78
        %p170 = pneg %p75
        %p171 = scmp.lt.s32.totalorder %s21, 1
        %s172 = scalar_select %p171, %s21, 1
        %s173 = smul.addr %s172, 2
        %s174 = smul.addr %s173, 8
        %s175 = scalar_lea.vmem %s1, %s174
        %p176 = pneg %p104
        %p177 = pneg %p101
        %p178 = scmp.lt.s32.totalorder %s21, 1
        %s179 = scalar_select %p178, %s21, 1
        %s180 = smul.addr %s179, 2
        %s181 = smul.addr %s180, 8
        %s182 = scalar_lea.vmem %s2, %s181
        %s183 = sadd.s32 %s21, %s22
        %s184 = smul.u32 4, %s183
        %p185 = scmp.lt.s32.totalorder %s21, 1
        %s186 = scalar_select %p185, %s21, 1
        %s187 = smul.addr %s186, 2
        %s188 = smul.addr %s187, 8
        %s189 = scalar_lea.vmem %s1, %s188
        %p190 = scmp.lt.s32.totalorder %s21, 1
        %s191 = scalar_select %p190, %s21, 1
        %s192 = smul.addr %s191, 2
        %s193 = smul.addr %s192, 8
        %s194 = scalar_lea.vmem %s2, %s193
        %p195 = scmp.eq.s32.totalorder %s22, 0
        // Predicated region
        $region29: #{tpu_custom_call.1} parent=23 // pred_check
          %p196 = pneg %p195
        $region30: #{tpu_custom_call.1} parent=23 // pred_check_branch
          %198 = sbr.rel (%p196) target = $region32
        $region31: #{tpu_custom_call.1} parent=23 // pred_region
          %vm199 = vcmask 130048
          %200 = vst.msk [vmem:[#allocation2] sm:$0xff] %vm199, 0.0
          %vm201 = vcmask 129024
          %202 = vst.msk [vmem:[#allocation2 + $0x8] sm:$0x7f] %vm201, 0.0
          %vm203 = vcmask 121856
          %204 = vst.msk [vmem:[#allocation3] sm:$0xff] %vm203, 0.0
          %205 = vst.msk [vmem:[#allocation3 + $0x8] sm:$0xff] %vm203, 0.0
        $region32: #{tpu_custom_call.1} parent=23 // pred_fallthru
          _
        %v206 = vld [vmem:[%s157] sm:$0xff]
        %v207 = vld [vmem:[%s157 + $0x8] sm:$0xff]
        %v208 = vld [vmem:[%s157 + $0x10] sm:$0xff]
        %v209 = vld [vmem:[%s157 + $0x18] sm:$0xff]
        %v210 = vld [vmem:[%s157 + $0x20] sm:$0xff]
        %v211 = vld [vmem:[%s157 + $0x28] sm:$0xff]
        %v212 = vld [vmem:[%s157 + $0x30] sm:$0xff]
        %v213 = vld [vmem:[%s157 + $0x38] sm:$0xff]
        %vm222 = vcmask 1040384
        %v223 = vrot.slane %v206, 7
        %v224 = vrot.slane %v207, 7
        %v225 = vsel %vm222, %v223, %v224
        %v226 = vrot.slane %v208, 7
        %v227 = vrot.slane %v209, 7
        %v228 = vsel %vm222, %v226, %v227
        %v229 = vrot.slane %v210, 7
        %v230 = vrot.slane %v211, 7
        %v231 = vsel %vm222, %v229, %v230
        %v232 = vrot.slane %v212, 7
        %v233 = vrot.slane %v213, 7
        %v234 = vsel %vm222, %v232, %v233
        %v243 = vsub.f32 %v206, %v223
        %v244 = vsub.f32 %v207, %v225
        %v245 = vsub.f32 %v208, %v226
        %v246 = vsub.f32 %v209, %v228
        %v247 = vsub.f32 %v210, %v229
        %v248 = vsub.f32 %v211, %v231
        %v249 = vsub.f32 %v212, %v232
        %v250 = vsub.f32 %v213, %v234
        %251 = vrot.lane.b32.xlu0 %v206, 1
        %v252 = vpop.permute.xlu0 %251
        %253 = vrot.lane.b32.xlu0 %v207, 1
        %v254 = vpop.permute.xlu0 %253
        %255 = vrot.lane.b32.xlu0 %v208, 1
        %v256 = vpop.permute.xlu0 %255
        %257 = vrot.lane.b32.xlu0 %v209, 1
        %v258 = vpop.permute.xlu0 %257
        %259 = vrot.lane.b32.xlu0 %v210, 1
        %v260 = vpop.permute.xlu0 %259
        %261 = vrot.lane.b32.xlu0 %v211, 1
        %v262 = vpop.permute.xlu0 %261
        %263 = vrot.lane.b32.xlu0 %v212, 1
        %v264 = vpop.permute.xlu0 %263
        %265 = vrot.lane.b32.xlu0 %v213, 1
        %v266 = vpop.permute.xlu0 %265
        %v275 = vsub.f32 %v206, %v252
        %v276 = vsub.f32 %v207, %v254
        %v277 = vsub.f32 %v208, %v256
        %v278 = vsub.f32 %v209, %v258
        %v279 = vsub.f32 %v210, %v260
        %v280 = vsub.f32 %v211, %v262
        %v281 = vsub.f32 %v212, %v264
        %v282 = vsub.f32 %v213, %v266
        %v283 = vld [vmem:[#allocation2] sm:$0xff]
        %v284 = vld [vmem:[#allocation2 + $0x8] sm:$0x7f]
        %v285 = vmul.f32 %v243, %v243
        %v286 = vmul.f32 %v244, %v244
        %v287 = vmul.f32 %v245, %v245
        %v288 = vmul.f32 %v246, %v246
        %v289 = vmul.f32 %v247, %v247
        %v290 = vmul.f32 %v248, %v248
        %v291 = vmul.f32 %v249, %v249
        %v292 = vmul.f32 %v250, %v250
        %vm293 = vcmask 130049
        %v294 = vsel %vm293, %v285, 0.0
        %v295 = vsel %vm293, %v287, 0.0
        %v296 = vadd.f32 %v294, %v295
        %v297 = vsel %vm293, %v289, 0.0
        %v298 = vadd.f32 %v296, %v297
        %v299 = vsel %vm293, %v291, 0.0
        %v300 = vadd.f32 %v298, %v299
        %vm301 = vcmask 130048
        %v302 = vsel %vm301, %v286, 0.0
        %v303 = vsel %vm301, %v288, 0.0
        %v304 = vadd.f32 %v302, %v303
        %v305 = vsel %vm301, %v290, 0.0
        %v306 = vadd.f32 %v304, %v305
        %v307 = vsel %vm301, %v292, 0.0
        %v308 = vadd.f32 %v306, %v307
        %vm311 = vcmask 1046528
        %v312 = vrot.slane %v300, 1
        %v313 = vrot.slane %v308, 1
        %v314 = vsel %vm311, %v312, %v313
        %v317 = vadd.f32 %v283, %v314
        %v318 = vadd.f32 %v284, %v313
        %319 = vst.msk [vmem:[#allocation2] sm:$0xff] %vm301, %v317
        %vm320 = vcmask 129024
        %321 = vst.msk [vmem:[#allocation2 + $0x8] sm:$0x7f] %vm320, %v318
        %v322 = vld [vmem:[#allocation3] sm:$0xff]
        %v323 = vld [vmem:[#allocation3 + $0x8] sm:$0xff]
        %v324 = vmul.f32 %v275, %v275
        %v325 = vmul.f32 %v276, %v276
        %v326 = vmul.f32 %v277, %v277
        %v327 = vmul.f32 %v278, %v278
        %v328 = vmul.f32 %v279, %v279
        %v329 = vmul.f32 %v280, %v280
        %v330 = vmul.f32 %v281, %v281
        %v331 = vmul.f32 %v282, %v282
        %vm332 = vcmask 130056
        %v333 = vsel %vm332, %v324, 0.0
        %v334 = vsel %vm332, %v326, 0.0
        %v335 = vadd.f32 %v333, %v334
        %v336 = vsel %vm332, %v328, 0.0
        %v337 = vadd.f32 %v335, %v336
        %v338 = vsel %vm332, %v330, 0.0
        %v339 = vadd.f32 %v337, %v338
        %v340 = vsel %vm332, %v325, 0.0
        %v341 = vsel %vm332, %v327, 0.0
        %v342 = vadd.f32 %v340, %v341
        %v343 = vsel %vm332, %v329, 0.0
        %v344 = vadd.f32 %v342, %v343
        %v345 = vsel %vm332, %v331, 0.0
        %v346 = vadd.f32 %v344, %v345
        %349 = vrot.lane.b32.xlu0 %v339, 127
        %v350 = vpop.permute.xlu0 %349
        %351 = vrot.lane.b32.xlu0 %v346, 127
        %v352 = vpop.permute.xlu0 %351
        %v355 = vadd.f32 %v322, %v350
        %v356 = vadd.f32 %v323, %v352
        %vm357 = vcmask 121856
        %358 = vst.msk [vmem:[#allocation3] sm:$0xff] %vm357, %v355
        %359 = vst.msk [vmem:[#allocation3 + $0x8] sm:$0xff] %vm357, %v356
        // Predicated region
        $region33: #{tpu_custom_call.1} parent=23 // pred_check
          %p360 = pneg %p195
        $region34: #{tpu_custom_call.1} parent=23 // pred_check_branch
          %362 = sbr.rel (%p360) target = $region36
        $region35: #{tpu_custom_call.1} parent=23 // pred_region
          %v363 = vld [vmem:[#allocation2] sm:$0xff]
          %v364 = vld [vmem:[#allocation2 + $0x8] sm:$0x7f]
          %365 = vst.msk [vmem:[%s189] sm:$0xff] %vm301, %v363
          %366 = vst.msk [vmem:[%s189 + $0x8] sm:$0x7f] %vm320, %v364
          %v367 = vld [vmem:[#allocation3] sm:$0xff]
          %v368 = vld [vmem:[#allocation3 + $0x8] sm:$0xff]
          %369 = vst.msk [vmem:[%s194] sm:$0xff] %vm357, %v367
          %370 = vst.msk [vmem:[%s194 + $0x8] sm:$0xff] %vm357, %v368
        $region36: #{tpu_custom_call.1} parent=23 // pred_fallthru
          _
        %p371 = scmp.lt.s32.totalorder %s21, 1
        %s372 = scalar_select %p371, %s21, 1
        %s373 = smul.addr %s372, 2
        %s374 = smul.addr %s373, 8
        %s375 = scalar_lea.vmem %s1, %s374
        %p376 = scmp.lt.s32.totalorder %s21, 1
        %s377 = scalar_select %p376, %s21, 1
        %s378 = smul.addr %s377, 2
        %s379 = smul.addr %s378, 8
        %s380 = scalar_lea.vmem %s2, %s379
        // Predicated region
        $region37: #{tpu_custom_call.1} parent=23 // pred_check
          %p381 = pneg %p75
        $region38: #{tpu_custom_call.1} parent=23 // pred_check_branch
          %383 = sbr.rel (%p381) target = $region40
        $region39: #{tpu_custom_call.1} parent=23 // pred_region
          _
        $region40: #{tpu_custom_call.1} parent=23 // pred_fallthru
          _
        // Predicated region
        $region41: #{tpu_custom_call.1} parent=23 // pred_check
          %p384 = pneg %p101
        $region42: #{tpu_custom_call.1} parent=23 // pred_check_branch
          %386 = sbr.rel (%p384) target = $region44
        $region43: #{tpu_custom_call.1} parent=23 // pred_region
          _
        $region44: #{tpu_custom_call.1} parent=23 // pred_fallthru
          _
      $region24: #{tpu_custom_call.1} parent=5 // pred_fallthru
        _
      %p387 = scmp.le.s32.totalorder 2, %s12
      // Predicated region
      $region45: #{tpu_custom_call.1} parent=5 // pred_check
        %p388 = pneg %p387
      $region46: #{tpu_custom_call.1} parent=5 // pred_check_branch
        %390 = sbr.rel (%p388) target = $region48
      $region47: #{tpu_custom_call.1} parent=5 // pred_region
        %s391 = ssub.s32 %s12, 2
        // Predicated region
        $region49: #{tpu_custom_call.1} parent=47 // pred_check
          %p392 = pneg %p81
        $region50: #{tpu_custom_call.1} parent=47 // pred_check_branch
          %394 = sbr.rel (%p392) target = $region52
        $region51: #{tpu_custom_call.1} parent=47 // pred_region
          %p395 = scmp.lt.s32.totalorder %s23, 1
          %s396 = scalar_select %p395, %s23, 1
          %s397 = smul.addr %s396, 2
          %s398 = smul.addr %s397, 8
          %s399 = scalar_lea.vmem %s1, %s398
        $region52: #{tpu_custom_call.1} parent=47 // pred_fallthru
          _
        // Predicated region
        $region53: #{tpu_custom_call.1} parent=47 // pred_check
          %p400 = pneg %p107
        $region54: #{tpu_custom_call.1} parent=47 // pred_check_branch
          %402 = sbr.rel (%p400) target = $region56
        $region55: #{tpu_custom_call.1} parent=47 // pred_region
          %p403 = scmp.lt.s32.totalorder %s23, 1
          %s404 = scalar_select %p403, %s23, 1
          %s405 = smul.addr %s404, 2
          %s406 = smul.addr %s405, 8
          %s407 = scalar_lea.vmem %s2, %s406
        $region56: #{tpu_custom_call.1} parent=47 // pred_fallthru
          _
      $region48: #{tpu_custom_call.1} parent=5 // pred_fallthru
        _
    $region6: #{tpu_custom_call.1} parent=1 // loop_footer
      %s16 = sadd.s32 1, %s12
    $region7: #{tpu_custom_call.1} parent=1 // loop_footer_branch
      %11 = sbr.rel target = $region3
    $region8: #{tpu_custom_call.1} parent=1 // loop_exit
      _
    %408 = vsyncpa [#allocation5], 1
    %s409 = scalar_lea.sflag [#allocation5], 1
    %410 = vsyncpa %s409, 1

</llo_original>
